<compile_context>
chip_gen: v5e
topology: v5e:2x2
jax: 0.10.0
libtpu: 0.0.40
codegen_flags: <defaults>
</compile_context>

<pallas_src>
import functools

import jax
import jax.numpy as jnp
from jax import lax
from jax.experimental import pallas as pl
from jax.experimental.pallas import tpu as pltpu


def head_kernel(x_ref, wk_ref, bk_ref, wq_ref, bq_ref, wv_ref, bv_ref, o_ref):
    x = x_ref[...]                                   # (Bblk, T, C)

    # Projections: contract C.  (Bblk, T, C) @ (C, H) -> (Bblk, T, H).
    # B and T are both free LHS dims, so the MXU effectively sees one
    # (Bblk*T, C) x (C, H) matmul (batch folded into M).
    proj = functools.partial(
        lax.dot_general,
        dimension_numbers=(((2,), (0,)), ((), ())),
        preferred_element_type=jnp.float32,
    )
    k = proj(x, wk_ref[...]) + bk_ref[...]           # (Bblk, T, H)
    q = proj(x, wq_ref[...]) + bq_ref[...]
    v = proj(x, wv_ref[...]) + bv_ref[...]

    head_size = k.shape[-1]
    # Scale q (T x H) rather than wei (T x T): T/H-fold less VPU work.
    q = q * (jnp.float32(head_size) ** -0.5)

    # Attention scores: batched q @ k^T without materializing a transpose --
    # contract the last axis of q with the last axis of k, batch over B.
    wei = lax.dot_general(
        q, k,
        dimension_numbers=(((2,), (2,)), ((0,), (0,))),
        preferred_element_type=jnp.float32,
    )                                                # (Bblk, T, T)

    # Numerically-stable softmax along the last axis.
    wei = wei - jnp.max(wei, axis=-1, keepdims=True)
    p = jnp.exp(wei)
    p = p * pl.reciprocal(jnp.sum(p, axis=-1, keepdims=True), approx=True)

    # dropout(p) == identity in eval mode.

    # out = p @ v, batched over B: contract p's key axis with v's seq axis.
    out = lax.dot_general(
        p, v,
        dimension_numbers=(((2,), (1,)), ((0,), (0,))),
        preferred_element_type=jnp.float32,
    )                                                # (Bblk, T, H)
    o_ref[...] = out.astype(o_ref.dtype)


def head_forward(x, wk, bk, wq, bq, wv, bv, *, batch_block=None):
    """Single-head self-attention (eval mode).

    x: (B, T, C); w*: (C, H) pre-transposed nn.Linear weights; b*: (1, H).
    Returns (B, T, H).

    batch_block: batch elements per grid step.  Default = B (whole problem in
    one step -- best at small shapes).  On v7x with larger B, set B//2 so the
    parallel batch axis shards across its 2 TensorCores.
    """
    B, T, C = x.shape
    H = wk.shape[1]
    bb = B if batch_block is None else batch_block
    grid = (pl.cdiv(B, bb),)

    full_w = pl.BlockSpec((C, H), lambda i: (0, 0))
    full_b = pl.BlockSpec((1, H), lambda i: (0, 0))

    return pl.pallas_call(
        head_kernel,
        out_shape=jax.ShapeDtypeStruct((B, T, H), x.dtype),
        grid_spec=pltpu.PrefetchScalarGridSpec(
            num_scalar_prefetch=0,
            grid=grid,
            in_specs=[
                pl.BlockSpec((bb, T, C), lambda i: (i, 0, 0)),  # x
                full_w, full_b,                                 # key
                full_w, full_b,                                 # query
                full_w, full_b,                                 # value
            ],
            out_specs=pl.BlockSpec((bb, T, H), lambda i: (i, 0, 0)),
        ),
        compiler_params=pltpu.CompilerParams(
            dimension_semantics=("parallel",),
        ),
    )(x, wk, bk, wq, bq, wv, bv)


def _ref(x, wk, bk, wq, bq, wv, bv):
    # pure-JAX reference mirroring the PyTorch forward (eval mode)
    k = x @ wk + bk
    q = x @ wq + bq
    v = x @ wv + bv
    wei = (q @ jnp.swapaxes(k, -2, -1)) * (k.shape[-1] ** -0.5)
    wei = jax.nn.softmax(wei, axis=-1)
    return wei @ v


if __name__ == "__main__":
    # module config
    n_embd = 32      # C
    head_size = 16   # H
    B, T = 2, 8

    key = jax.random.PRNGKey(0)
    k_x, k_wk, k_bk, k_wq, k_bq, k_wv, k_bv = jax.random.split(key, 7)

    # nn.Linear(n_embd, head_size): weight (H, C), bias (H); init U(-1/sqrt(C), 1/sqrt(C))
    bound = 1.0 / (n_embd ** 0.5)

    def lin_params(kw, kb):
        w = jax.random.uniform(kw, (head_size, n_embd), jnp.float32, -bound, bound)
        b = jax.random.uniform(kb, (head_size,), jnp.float32, -bound, bound)
        # store pre-transposed (C, H) and bias (1, H) for the kernel
        return w.T, b[None, :]

    wk, bk = lin_params(k_wk, k_bk)
    wq, bq = lin_params(k_wq, k_bq)
    wv, bv = lin_params(k_wv, k_bv)

    x = jax.random.normal(k_x, (B, T, n_embd), jnp.float32)

    out = head_forward(x, wk, bk, wq, bq, wv, bv)
    out = jax.block_until_ready(out)

    ref = _ref(x, wk, bk, wq, bq, wv, bv)
    assert out.shape == (B, T, head_size)
    # tolerance relaxed slightly: softmax denominator uses the EUP approximate
    # reciprocal (pl.reciprocal(..., approx=True)).
    assert jnp.allclose(out, ref, atol=2e-3, rtol=2e-3), \
        f"max abs err {jnp.max(jnp.abs(out - ref))}"

    print("KERNEL_OK")
</pallas_src>

<mosaic_0001>
module attributes {stable_mosaic.version = 11 : i64} {
  func.func @head_kernel(%arg0: i32, %arg1: memref<2x8x32xf32, #tpu.memory_space<vmem>>, %arg2: memref<32x16xf32, #tpu.memory_space<vmem>>, %arg3: memref<1x16xf32, #tpu.memory_space<vmem>>, %arg4: memref<32x16xf32, #tpu.memory_space<vmem>>, %arg5: memref<1x16xf32, #tpu.memory_space<vmem>>, %arg6: memref<32x16xf32, #tpu.memory_space<vmem>>, %arg7: memref<1x16xf32, #tpu.memory_space<vmem>>, %arg8: memref<2x8x16xf32, #tpu.memory_space<vmem>>) attributes {dimension_semantics = [#tpu.dimension_semantics<parallel>], iteration_bounds = array<i64: 1>, scalar_prefetch = 0 : i64, scratch_operands = 0 : i64, tpu.core_type = #tpu.core_type<tc>, window_params = [{transform_indices = @transform_0, window_bounds = array<i64: 2, 8, 32>}, {pipeline_mode = #tpu.pipeline_mode<synchronous>, transform_indices = @transform_1, window_bounds = array<i64: 32, 16>}, {pipeline_mode = #tpu.pipeline_mode<synchronous>, transform_indices = @transform_2, window_bounds = array<i64: 1, 16>}, {pipeline_mode = #tpu.pipeline_mode<synchronous>, transform_indices = @transform_3, window_bounds = array<i64: 32, 16>}, {pipeline_mode = #tpu.pipeline_mode<synchronous>, transform_indices = @transform_4, window_bounds = array<i64: 1, 16>}, {pipeline_mode = #tpu.pipeline_mode<synchronous>, transform_indices = @transform_5, window_bounds = array<i64: 32, 16>}, {pipeline_mode = #tpu.pipeline_mode<synchronous>, transform_indices = @transform_6, window_bounds = array<i64: 1, 16>}, {transform_indices = @transform_7, window_bounds = array<i64: 2, 8, 16>}]} {
    %c0 = arith.constant 0 : index
    %c0_0 = arith.constant 0 : index
    %c0_1 = arith.constant 0 : index
    %0 = vector.load %arg1[%c0, %c0_0, %c0_1] : memref<2x8x32xf32, #tpu.memory_space<vmem>>, vector<2x8x32xf32>
    %c0_2 = arith.constant 0 : index
    %c0_3 = arith.constant 0 : index
    %1 = vector.load %arg2[%c0_2, %c0_3] : memref<32x16xf32, #tpu.memory_space<vmem>>, vector<32x16xf32>
    %cst = arith.constant dense<0.000000e+00> : vector<2x8x16xf32>
    %2 = tpu.matmul %0, %1, %cst {dimension_numbers = #tpu.dot_dimension_numbers<[2], [0], [0, 1], [1], [0, 0, 0, 1, 1, 1], [], []>} : vector<2x8x32xf32>, vector<32x16xf32>, vector<2x8x16xf32> -> vector<2x8x16xf32>
    %c0_4 = arith.constant 0 : index
    %c0_5 = arith.constant 0 : index
    %3 = vector.load %arg3[%c0_4, %c0_5] : memref<1x16xf32, #tpu.memory_space<vmem>>, vector<1x16xf32>
    %4 = vector.shape_cast %3 : vector<1x16xf32> to vector<1x1x16xf32>
    %5 = vector.broadcast %4 : vector<1x1x16xf32> to vector<2x8x16xf32>
    %6 = arith.addf %2, %5 : vector<2x8x16xf32>
    %c0_6 = arith.constant 0 : index
    %c0_7 = arith.constant 0 : index
    %7 = vector.load %arg4[%c0_6, %c0_7] : memref<32x16xf32, #tpu.memory_space<vmem>>, vector<32x16xf32>
    %cst_8 = arith.constant dense<0.000000e+00> : vector<2x8x16xf32>
    %8 = tpu.matmul %0, %7, %cst_8 {dimension_numbers = #tpu.dot_dimension_numbers<[2], [0], [0, 1], [1], [0, 0, 0, 1, 1, 1], [], []>} : vector<2x8x32xf32>, vector<32x16xf32>, vector<2x8x16xf32> -> vector<2x8x16xf32>
    %c0_9 = arith.constant 0 : index
    %c0_10 = arith.constant 0 : index
    %9 = vector.load %arg5[%c0_9, %c0_10] : memref<1x16xf32, #tpu.memory_space<vmem>>, vector<1x16xf32>
    %10 = vector.shape_cast %9 : vector<1x16xf32> to vector<1x1x16xf32>
    %11 = vector.broadcast %10 : vector<1x1x16xf32> to vector<2x8x16xf32>
    %12 = arith.addf %8, %11 : vector<2x8x16xf32>
    %c0_11 = arith.constant 0 : index
    %c0_12 = arith.constant 0 : index
    %13 = vector.load %arg6[%c0_11, %c0_12] : memref<32x16xf32, #tpu.memory_space<vmem>>, vector<32x16xf32>
    %cst_13 = arith.constant dense<0.000000e+00> : vector<2x8x16xf32>
    %14 = tpu.matmul %0, %13, %cst_13 {dimension_numbers = #tpu.dot_dimension_numbers<[2], [0], [0, 1], [1], [0, 0, 0, 1, 1, 1], [], []>} : vector<2x8x32xf32>, vector<32x16xf32>, vector<2x8x16xf32> -> vector<2x8x16xf32>
    %c0_14 = arith.constant 0 : index
    %c0_15 = arith.constant 0 : index
    %15 = vector.load %arg7[%c0_14, %c0_15] : memref<1x16xf32, #tpu.memory_space<vmem>>, vector<1x16xf32>
    %16 = vector.shape_cast %15 : vector<1x16xf32> to vector<1x1x16xf32>
    %17 = vector.broadcast %16 : vector<1x1x16xf32> to vector<2x8x16xf32>
    %18 = arith.addf %14, %17 : vector<2x8x16xf32>
    %cst_16 = arith.constant 1.600000e+01 : f32
    %cst_17 = arith.constant -5.000000e-01 : f32
    %19 = math.powf %cst_16, %cst_17 : f32
    %20 = vector.broadcast %19 : f32 to vector<2x8x16xf32>
    %21 = arith.mulf %12, %20 : vector<2x8x16xf32>
    %cst_18 = arith.constant dense<0.000000e+00> : vector<2x8x8xf32>
    %22 = tpu.matmul %21, %6, %cst_18 {dimension_numbers = #tpu.dot_dimension_numbers<[2], [2], [1], [1], [0, 0, 0, 1, 1, 1], [0], [0]>} : vector<2x8x16xf32>, vector<2x8x16xf32>, vector<2x8x8xf32> -> vector<2x8x8xf32>
    %cst_19 = arith.constant dense<0xFF800000> : vector<2x8xf32>
    %23 = vector.multi_reduction <maximumf>, %22, %cst_19 [2] : vector<2x8x8xf32> to vector<2x8xf32>
    %24 = vector.shape_cast %23 : vector<2x8xf32> to vector<2x8x1xf32>
    %25 = vector.broadcast %24 : vector<2x8x1xf32> to vector<2x8x8xf32>
    %26 = arith.subf %22, %25 : vector<2x8x8xf32>
    %27 = math.exp %26 : vector<2x8x8xf32>
    %cst_20 = arith.constant dense<0.000000e+00> : vector<2x8xf32>
    %28 = vector.multi_reduction <add>, %27, %cst_20 [2] : vector<2x8x8xf32> to vector<2x8xf32>
    %29 = vector.shape_cast %28 : vector<2x8xf32> to vector<2x8x1xf32>
    %30 = tpu.reciprocal %29 {approx = true} : vector<2x8x1xf32> -> vector<2x8x1xf32>
    %31 = vector.broadcast %30 : vector<2x8x1xf32> to vector<2x8x8xf32>
    %32 = arith.mulf %27, %31 : vector<2x8x8xf32>
    %cst_21 = arith.constant dense<0.000000e+00> : vector<2x8x16xf32>
    %33 = tpu.matmul %32, %18, %cst_21 {dimension_numbers = #tpu.dot_dimension_numbers<[2], [1], [1], [2], [0, 0, 0, 1, 1, 2], [0], [0]>} : vector<2x8x8xf32>, vector<2x8x16xf32>, vector<2x8x16xf32> -> vector<2x8x16xf32>
    %c0_22 = arith.constant 0 : index
    %c0_23 = arith.constant 0 : index
    %c0_24 = arith.constant 0 : index
    %34 = vector.load %arg8[%c0_22, %c0_23, %c0_24] : memref<2x8x16xf32, #tpu.memory_space<vmem>>, vector<2x8x16xf32>
    tpu.vector_store %arg8[%c0_22, %c0_23, %c0_24], %33 {strides = array<i32>} : memref<2x8x16xf32, #tpu.memory_space<vmem>>, vector<2x8x16xf32>,
    return
  }
  func.func @transform_0(%arg0: i32) -> (i32, i32, i32) {
    %c0_i32 = arith.constant 0 : i32
    %c0_i32_0 = arith.constant 0 : i32
    %c0_i32_1 = arith.constant 0 : i32
    return %arg0, %c0_i32, %c0_i32_0 : i32, i32, i32
  }
  func.func @transform_1(%arg0: i32) -> (i32, i32) {
    %c0_i32 = arith.constant 0 : i32
    %c0_i32_0 = arith.constant 0 : i32
    %c0_i32_1 = arith.constant 0 : i32
    return %c0_i32, %c0_i32_0 : i32, i32
  }
  func.func @transform_2(%arg0: i32) -> (i32, i32) {
    %c0_i32 = arith.constant 0 : i32
    %c0_i32_0 = arith.constant 0 : i32
    %c0_i32_1 = arith.constant 0 : i32
    return %c0_i32, %c0_i32_0 : i32, i32
  }
  func.func @transform_3(%arg0: i32) -> (i32, i32) {
    %c0_i32 = arith.constant 0 : i32
    %c0_i32_0 = arith.constant 0 : i32
    %c0_i32_1 = arith.constant 0 : i32
    return %c0_i32, %c0_i32_0 : i32, i32
  }
  func.func @transform_4(%arg0: i32) -> (i32, i32) {
    %c0_i32 = arith.constant 0 : i32
    %c0_i32_0 = arith.constant 0 : i32
    %c0_i32_1 = arith.constant 0 : i32
    return %c0_i32, %c0_i32_0 : i32, i32
  }
  func.func @transform_5(%arg0: i32) -> (i32, i32) {
    %c0_i32 = arith.constant 0 : i32
    %c0_i32_0 = arith.constant 0 : i32
    %c0_i32_1 = arith.constant 0 : i32
    return %c0_i32, %c0_i32_0 : i32, i32
  }
  func.func @transform_6(%arg0: i32) -> (i32, i32) {
    %c0_i32 = arith.constant 0 : i32
    %c0_i32_0 = arith.constant 0 : i32
    %c0_i32_1 = arith.constant 0 : i32
    return %c0_i32, %c0_i32_0 : i32, i32
  }
  func.func @transform_7(%arg0: i32) -> (i32, i32, i32) {
    %c0_i32 = arith.constant 0 : i32
    %c0_i32_0 = arith.constant 0 : i32
    %c0_i32_1 = arith.constant 0 : i32
    return %arg0, %c0_i32, %c0_i32_0 : i32, i32, i32
  }
}

</mosaic_0001>

<llo_original>
// kernel: tpu_custom_call.1
$region0: #{tpu_custom_call.1}
  #allocation0 [shape = 'u32[]', space=smem, size = 0x4, offset = 0x4, fixed_abs, tag = 'smem constant byte address 0x4 - core index']
  #allocation1 [shape = 'u32[72,128]{1,0:T(1,128)}', space=vmem, size = 0x9000, scoped, tag = 'internal scratch']
  %s0 = inlined_call_operand.vmem [shape: f32[2,8,32], index: 0, kind: input, shape index: {}]
  %s1 = inlined_call_operand.vmem [shape: f32[32,16], index: 1, kind: input, shape index: {}]
  %s2 = inlined_call_operand.vmem [shape: f32[1,16], index: 2, kind: input, shape index: {}]
  %s3 = inlined_call_operand.vmem [shape: f32[32,16], index: 3, kind: input, shape index: {}]
  %s4 = inlined_call_operand.vmem [shape: f32[1,16], index: 4, kind: input, shape index: {}]
  %s5 = inlined_call_operand.vmem [shape: f32[32,16], index: 5, kind: input, shape index: {}]
  %s6 = inlined_call_operand.vmem [shape: f32[1,16], index: 6, kind: input, shape index: {}]
  %s7 = inlined_call_operand.hbm [shape: f32[2,8,16], index: 7, kind: output, shape index: {}]
  %s8 = sld [smem:[#allocation0]]
  $region38: #{tpu_custom_call.1} parent=0
    _
  %s10 = ssub.s32 1, %s8
  %s11 = scalar_select 0, %s10, %s8
  $region1: #{tpu_custom_call.1} parent=0
    #allocation2 [shape = 'u8[8192]{0}', space=vmem, size = 0x2000, scoped, tag = 'output window, operand 0, single buffered']
    #allocation3 [shape = 's32[1]{0}', space=sflag, size = 0x4, scoped, tag = 'scoped memory for tpu_custom_call.1']
    %12 = vsyncpa [#allocation3], 0
    // Predicated region
    $region2: #{tpu_custom_call.1} parent=1 // pred_check
      _
    $region3: #{tpu_custom_call.1} parent=1 // pred_check_branch
      %14 = sbr.rel (0) target = $region5
    $region4: #{tpu_custom_call.1} parent=1 // pred_region
      _
    $region5: #{tpu_custom_call.1} parent=1 // pred_fallthru
      _
    // Predicated region
    $region6: #{tpu_custom_call.1} parent=1 // pred_check
      _
    $region7: #{tpu_custom_call.1} parent=1 // pred_check_branch
      %16 = sbr.rel (0) target = $region9
    $region8: #{tpu_custom_call.1} parent=1 // pred_region
      _
    $region9: #{tpu_custom_call.1} parent=1 // pred_fallthru
      _
    // Predicated region
    $region10: #{tpu_custom_call.1} parent=1 // pred_check
      _
    $region11: #{tpu_custom_call.1} parent=1 // pred_check_branch
      %18 = sbr.rel (0) target = $region13
    $region12: #{tpu_custom_call.1} parent=1 // pred_region
      _
    $region13: #{tpu_custom_call.1} parent=1 // pred_fallthru
      _
    // Predicated region
    $region14: #{tpu_custom_call.1} parent=1 // pred_check
      _
    $region15: #{tpu_custom_call.1} parent=1 // pred_check_branch
      %20 = sbr.rel (0) target = $region17
    $region16: #{tpu_custom_call.1} parent=1 // pred_region
      _
    $region17: #{tpu_custom_call.1} parent=1 // pred_fallthru
      _
    // Predicated region
    $region18: #{tpu_custom_call.1} parent=1 // pred_check
      _
    $region19: #{tpu_custom_call.1} parent=1 // pred_check_branch
      %22 = sbr.rel (0) target = $region21
    $region20: #{tpu_custom_call.1} parent=1 // pred_region
      _
    $region21: #{tpu_custom_call.1} parent=1 // pred_fallthru
      _
    // Predicated region
    $region22: #{tpu_custom_call.1} parent=1 // pred_check
      _
    $region23: #{tpu_custom_call.1} parent=1 // pred_check_branch
      %24 = sbr.rel (0) target = $region25
    $region24: #{tpu_custom_call.1} parent=1 // pred_region
      _
    $region25: #{tpu_custom_call.1} parent=1 // pred_fallthru
      _
    // Predicated region
    $region26: #{tpu_custom_call.1} parent=1 // pred_check
      _
    $region27: #{tpu_custom_call.1} parent=1 // pred_check_branch
      %26 = sbr.rel (0) target = $region29
    $region28: #{tpu_custom_call.1} parent=1 // pred_region
      _
    $region29: #{tpu_custom_call.1} parent=1 // pred_fallthru
      _
    %v27 = vld [vmem:[%s0] sm:$0xff]
    %v28 = vld [vmem:[%s0 + $0x8] sm:$0xff]
    %v29 = vld [vmem:[%s1] sm:$0xff]
    %v30 = vld [vmem:[%s1 + $0x8] sm:$0xff]
    %v31 = vld [vmem:[%s1 + $0x10] sm:$0xff]
    %v32 = vld [vmem:[%s1 + $0x18] sm:$0xff]
    %v33 = vld [vmem:[%s2] sm:$0x1]
    %v35 = vperm.slane %v33, 0
    %vm37 = vcmask 261120
    %v39 = vsel %vm37, %v27, 0
    %v42 = vsel %vm37, %v28, 0
    %44 = vmatpush.msra.mxu0 0.0
    %45 = vmatpush.msra.mxu0 0.0
    %46 = vmatpush.msra.mxu0 0.0
    %47 = vmatpush.msra.mxu0 0.0
    %48 = vmatpush.msra.mxu0 0.0
    %49 = vmatpush.msra.mxu0 0.0
    %50 = vmatpush.msra.mxu0 0.0
    %51 = vmatpush.msra.mxu0 0.0
    %52 = vmatpush.msra.mxu0 0.0
    %53 = vmatpush.msra.mxu0 0.0
    %54 = vmatpush.msra.mxu0 0.0
    %55 = vmatpush.msra.mxu0 0.0
    %56 = vmatpush.msra.mxu0 %v32
    %57 = vmatpush.msra.mxu0 %v31
    %58 = vmatpush.msra.mxu0 %v30
    %59 = vmatpush.msra.mxu0 %v29
    %60 = vmatmul.f32.gmra.mxu0 %v39
    %v61 = vpop.f32.mrf.mxu0
    %v62 = vadd.f32 %v35, %v61
    %63 = vmatmul.f32.gmra.mxu0 %v42
    %v64 = vpop.f32.mrf.mxu0
    %v65 = vadd.f32 %v35, %v64
    %66 = vdwg.mxu0
    %v67 = vld [vmem:[%s3] sm:$0xff]
    %v68 = vld [vmem:[%s3 + $0x8] sm:$0xff]
    %v69 = vld [vmem:[%s3 + $0x10] sm:$0xff]
    %v70 = vld [vmem:[%s3 + $0x18] sm:$0xff]
    %v71 = vld [vmem:[%s4] sm:$0x1]
    %v73 = vperm.slane %v71, 0
    %75 = vmatpush.msra.mxu0 0.0
    %76 = vmatpush.msra.mxu0 0.0
    %77 = vmatpush.msra.mxu0 0.0
    %78 = vmatpush.msra.mxu0 0.0
    %79 = vmatpush.msra.mxu0 0.0
    %80 = vmatpush.msra.mxu0 0.0
    %81 = vmatpush.msra.mxu0 0.0
    %82 = vmatpush.msra.mxu0 0.0
    %83 = vmatpush.msra.mxu0 0.0
    %84 = vmatpush.msra.mxu0 0.0
    %85 = vmatpush.msra.mxu0 0.0
    %86 = vmatpush.msra.mxu0 0.0
    %87 = vmatpush.msra.mxu0 %v70
    %88 = vmatpush.msra.mxu0 %v69
    %89 = vmatpush.msra.mxu0 %v68
    %90 = vmatpush.msra.mxu0 %v67
    %91 = vmatmul.f32.gmra.mxu0 %v39
    %v92 = vpop.f32.mrf.mxu0
    %v93 = vadd.f32 %v73, %v92
    %94 = vmatmul.f32.gmra.mxu0 %v42
    %v95 = vpop.f32.mrf.mxu0
    %v96 = vadd.f32 %v73, %v95
    %97 = vdwg.mxu0
    %v98 = vld [vmem:[%s5] sm:$0xff]
    %v99 = vld [vmem:[%s5 + $0x8] sm:$0xff]
    %v100 = vld [vmem:[%s5 + $0x10] sm:$0xff]
    %v101 = vld [vmem:[%s5 + $0x18] sm:$0xff]
    %v102 = vld [vmem:[%s6] sm:$0x1]
    %v104 = vperm.slane %v102, 0
    %106 = vmatpush.msra.mxu0 0.0
    %107 = vmatpush.msra.mxu0 0.0
    %108 = vmatpush.msra.mxu0 0.0
    %109 = vmatpush.msra.mxu0 0.0
    %110 = vmatpush.msra.mxu0 0.0
    %111 = vmatpush.msra.mxu0 0.0
    %112 = vmatpush.msra.mxu0 0.0
    %113 = vmatpush.msra.mxu0 0.0
    %114 = vmatpush.msra.mxu0 0.0
    %115 = vmatpush.msra.mxu0 0.0
    %116 = vmatpush.msra.mxu0 0.0
    %117 = vmatpush.msra.mxu0 0.0
    %118 = vmatpush.msra.mxu0 %v101
    %119 = vmatpush.msra.mxu0 %v100
    %120 = vmatpush.msra.mxu0 %v99
    %121 = vmatpush.msra.mxu0 %v98
    %122 = vmatmul.f32.gmra.mxu0 %v39
    %v123 = vpop.f32.mrf.mxu0
    %v124 = vadd.f32 %v104, %v123
    %125 = vmatmul.f32.gmra.mxu0 %v42
    %v126 = vpop.f32.mrf.mxu0
    %v127 = vadd.f32 %v104, %v126
    %128 = vdwg.mxu0
    %v129 = vmul.f32 %v93, 0.25
    %v130 = vmul.f32 %v96, 0.25
    %vm131 = vcmask 130048
    %v133 = vsel %vm131, %v129, 0
    %v136 = vsel %vm131, %v62, 0
    %138 = vmatpush.xpose.msra.mxu0 0.0
    %139 = vmatpush.xpose.msra.mxu0 0.0
    %140 = vmatpush.xpose.msra.mxu0 0.0
    %141 = vmatpush.xpose.msra.mxu0 0.0
    %142 = vmatpush.xpose.msra.mxu0 0.0
    %143 = vmatpush.xpose.msra.mxu0 0.0
    %144 = vmatpush.xpose.msra.mxu0 0.0
    %145 = vmatpush.xpose.msra.mxu0 0.0
    %146 = vmatpush.xpose.msra.mxu0 0.0
    %147 = vmatpush.xpose.msra.mxu0 0.0
    %148 = vmatpush.xpose.msra.mxu0 0.0
    %149 = vmatpush.xpose.msra.mxu0 0.0
    %150 = vmatpush.xpose.msra.mxu0 0.0
    %151 = vmatpush.xpose.msra.mxu0 0.0
    %152 = vmatpush.xpose.msra.mxu0 0.0
    %153 = vmatpush.xpose.msra.mxu0 %v136
    %154 = vmatmul.f32.gmra.mxu0 %v133
    %v155 = vpop.f32.mrf.mxu0
    %v156 = vadd.f32 0.0, %v155
    %157 = vdwg.mxu0
    %v159 = vsel %vm131, %v130, 0
    %v162 = vsel %vm131, %v65, 0
    %164 = vmatpush.xpose.msra.mxu0 0.0
    %165 = vmatpush.xpose.msra.mxu0 0.0
    %166 = vmatpush.xpose.msra.mxu0 0.0
    %167 = vmatpush.xpose.msra.mxu0 0.0
    %168 = vmatpush.xpose.msra.mxu0 0.0
    %169 = vmatpush.xpose.msra.mxu0 0.0
    %170 = vmatpush.xpose.msra.mxu0 0.0
    %171 = vmatpush.xpose.msra.mxu0 0.0
    %172 = vmatpush.xpose.msra.mxu0 0.0
    %173 = vmatpush.xpose.msra.mxu0 0.0
    %174 = vmatpush.xpose.msra.mxu0 0.0
    %175 = vmatpush.xpose.msra.mxu0 0.0
    %176 = vmatpush.xpose.msra.mxu0 0.0
    %177 = vmatpush.xpose.msra.mxu0 0.0
    %178 = vmatpush.xpose.msra.mxu0 0.0
    %179 = vmatpush.xpose.msra.mxu0 %v162
    %180 = vmatmul.f32.gmra.mxu0 %v159
    %v181 = vpop.f32.mrf.mxu0
    %v182 = vadd.f32 0.0, %v181
    %183 = vdwg.mxu0
    %vm184 = vcmask 64512
    %v185 = vsel %vm184, %v156, -inf
    %186 = vmax.xlane.f32.xlu0 %v185
    %v187 = vpop.xlane.xlu0 %186
    %v188 = vsel %vm184, %v182, -inf
    %189 = vmax.xlane.f32.xlu0 %v188
    %v190 = vpop.xlane.xlu0 %189
    %v191 = vsub.f32 %v156, %v187
    %v192 = vsub.f32 %v182, %v190
    %v193 = vmul.f32 %v191, 1.442695
    %v194 = vpow.pop %v193
    %v195 = vmul.f32 %v192, 1.442695
    %v196 = vpow.pop %v195
    %v197 = vsel %vm184, %v194, 0.0
    %198 = vadd.xlane.f32.xlu0 %v197
    %v199 = vpop.xlane.xlu0 %198
    %v200 = vsel %vm184, %v196, 0.0
    %201 = vadd.xlane.f32.xlu0 %v200
    %v202 = vpop.xlane.xlu0 %201
    %v203 = vrcp.pop %v199
    %v204 = vrcp.pop %v202
    %v205 = vmul.f32 %v194, %v203
    %v206 = vmul.f32 %v196, %v204
    %v208 = vsel %vm184, %v205, 0
    %210 = vmatpush.msra.mxu0 0.0
    %211 = vmatpush.msra.mxu0 0.0
    %212 = vmatpush.msra.mxu0 0.0
    %213 = vmatpush.msra.mxu0 0.0
    %214 = vmatpush.msra.mxu0 0.0
    %215 = vmatpush.msra.mxu0 0.0
    %216 = vmatpush.msra.mxu0 0.0
    %217 = vmatpush.msra.mxu0 0.0
    %218 = vmatpush.msra.mxu0 0.0
    %219 = vmatpush.msra.mxu0 0.0
    %220 = vmatpush.msra.mxu0 0.0
    %221 = vmatpush.msra.mxu0 0.0
    %222 = vmatpush.msra.mxu0 0.0
    %223 = vmatpush.msra.mxu0 0.0
    %224 = vmatpush.msra.mxu0 0.0
    %225 = vmatpush.msra.mxu0 %v124
    %226 = vmatmul.f32.gmra.mxu0 %v208
    %v227 = vpop.f32.mrf.mxu0
    %v228 = vadd.f32 0.0, %v227
    %229 = vdwg.mxu0
    %v231 = vsel %vm184, %v206, 0
    %233 = vmatpush.msra.mxu0 0.0
    %234 = vmatpush.msra.mxu0 0.0
    %235 = vmatpush.msra.mxu0 0.0
    %236 = vmatpush.msra.mxu0 0.0
    %237 = vmatpush.msra.mxu0 0.0
    %238 = vmatpush.msra.mxu0 0.0
    %239 = vmatpush.msra.mxu0 0.0
    %240 = vmatpush.msra.mxu0 0.0
    %241 = vmatpush.msra.mxu0 0.0
    %242 = vmatpush.msra.mxu0 0.0
    %243 = vmatpush.msra.mxu0 0.0
    %244 = vmatpush.msra.mxu0 0.0
    %245 = vmatpush.msra.mxu0 0.0
    %246 = vmatpush.msra.mxu0 0.0
    %247 = vmatpush.msra.mxu0 0.0
    %248 = vmatpush.msra.mxu0 %v127
    %249 = vmatmul.f32.gmra.mxu0 %v231
    %v250 = vpop.f32.mrf.mxu0
    %v251 = vadd.f32 0.0, %v250
    %252 = vdwg.mxu0
    %253 = vst.msk [vmem:[#allocation2] sm:$0xff] %vm131, %v228
    %254 = vst.msk [vmem:[#allocation2 + $0x8] sm:$0xff] %vm131, %v251
    // Predicated region
    $region30: #{tpu_custom_call.1} parent=1 // pred_check
      _
    $region31: #{tpu_custom_call.1} parent=1 // pred_check_branch
      %256 = sbr.rel (0) target = $region33
    $region32: #{tpu_custom_call.1} parent=1 // pred_region
      %258 = vsyncadd [#allocation3], 0
      %s259 = sshll.u32 [#allocation2], 4
      %s260 = int_to_ptr.vmem [resolvable:$true] %s259
      %s261 = sshll.u32 %s7, 4
      %s262 = int_to_ptr.hbm [resolvable:$true] %s261
      %267 = dma.vmem_to_hbm [thread:$0]  %s260, 256, %s262, [#allocation3], 128, 128, 8
    $region33: #{tpu_custom_call.1} parent=1 // pred_fallthru
      _
    // Predicated region
    $region34: #{tpu_custom_call.1} parent=1 // pred_check
      _
    $region35: #{tpu_custom_call.1} parent=1 // pred_check_branch
      %269 = sbr.rel (0) target = $region37
    $region36: #{tpu_custom_call.1} parent=1 // pred_region
      %271 = dma.done [#allocation3], 256
    $region37: #{tpu_custom_call.1} parent=1 // pred_fallthru
      _
    %272 = vsyncpa [#allocation3], 1

</llo_original>
